<compile_context>
chip_gen: v7x
topology: tpu7x:2x2x1
jax: 0.10.0
libtpu: 0.0.40
codegen_flags: <defaults>
</compile_context>

<pallas_src>
import jax
import jax.numpy as jnp
from jax import lax
from jax.experimental import pallas as pl
from jax.experimental.pallas import tpu as pltpu

_VMEM_LIMIT = 32 * 1024 * 1024


def _round_up(x, m):
    return (x + m - 1) // m * m


# ---------------------------------------------------------------------------
# Stage 1: n_src = relu(h_src @ Qw + Qb), computed once, tiled over S.
# ---------------------------------------------------------------------------
def _project_kernel(h_src_ref, qw_ref, qb_ref, n_src_ref):
    n = jnp.dot(h_src_ref[...], qw_ref[...],
                preferred_element_type=jnp.float32)          # bf16 x bf16 -> f32
    n = jnp.maximum(n + qb_ref[...], 0.0)
    n_src_ref[...] = n.astype(n_src_ref.dtype)               # bf16 for next matmul


# ---------------------------------------------------------------------------
# Stage 2: weighted aggregation + output projection + L2 normalization.
#   grid = (B/tb, S/ts); S is a reduction axis with VMEM accumulators.
# ---------------------------------------------------------------------------
def _aggregate_kernel(h_dst_ref, a_ref, n_src_ref, w1_ref, w2_ref, wb_ref,
                      z_ref, acc_ref, ws_ref):
    j = pl.program_id(1)

    @pl.when(j == 0)
    def _():
        acc_ref[...] = jnp.zeros_like(acc_ref)
        ws_ref[...] = jnp.zeros_like(ws_ref)

    a = a_ref[...]                                            # (tb, ts) bf16
    acc_ref[...] += jnp.dot(a, n_src_ref[...],
                            preferred_element_type=jnp.float32)
    ws_ref[...] += jnp.sum(a.astype(jnp.float32), axis=-1, keepdims=True)

    @pl.when(j == pl.num_programs(1) - 1)
    def _():
        ws = jnp.maximum(ws_ref[...], 1.0)                    # clamp(min=1)
        n_dst = acc_ref[...] * pl.reciprocal(ws, approx=False)  # (tb, Hp) f32
        z = (jnp.dot(n_dst.astype(jnp.bfloat16), w1_ref[...],
                     preferred_element_type=jnp.float32)
             + jnp.dot(h_dst_ref[...], w2_ref[...],
                       preferred_element_type=jnp.float32)
             + wb_ref[...])
        z = jnp.maximum(z, 0.0)
        # L2 row-normalize; guard zero rows on the sum-of-squares, use rsqrt+mul.
        sumsq = jnp.sum(z * z, axis=-1, keepdims=True)
        inv_norm = jnp.where(sumsq > 0.0, lax.rsqrt(sumsq), 1.0)
        z_ref[...] = (z * inv_norm).astype(z_ref.dtype)


def weighted_sage_conv(h_src, h_dst, A, Qw, Qb, W1, W2, Wb, *, tb=128, ts=512):
    S, D_in = h_src.shape
    B, _ = h_dst.shape
    H = Qw.shape[1]
    D_out = W1.shape[1]

    # --- pad feature dims to 128 (lane-dense), node dims to tile multiples ---
    D_in_p = _round_up(D_in, 128)
    H_p = _round_up(H, 128)
    D_out_p = _round_up(D_out, 128)
    ts = min(ts, _round_up(S, 128))
    tb = min(tb, _round_up(B, 8))
    S_p = _round_up(S, ts)
    B_p = _round_up(B, tb)

    f32, bf16 = jnp.float32, jnp.bfloat16
    h_src_p = jnp.zeros((S_p, D_in_p), bf16).at[:S, :D_in].set(h_src.astype(bf16))
    h_dst_p = jnp.zeros((B_p, D_in_p), bf16).at[:B, :D_in].set(h_dst.astype(bf16))
    A_p = jnp.zeros((B_p, S_p), bf16).at[:B, :S].set(A.astype(bf16))
    Qw_p = jnp.zeros((D_in_p, H_p), bf16).at[:D_in, :H].set(Qw.astype(bf16))
    Qb_p = jnp.zeros((1, H_p), f32).at[:, :H].set(Qb.reshape(1, H).astype(f32))
    W1_p = jnp.zeros((H_p, D_out_p), bf16).at[:H, :D_out].set(W1.astype(bf16))
    W2_p = jnp.zeros((D_in_p, D_out_p), bf16).at[:D_in, :D_out].set(W2.astype(bf16))
    Wb_p = jnp.zeros((1, D_out_p), f32).at[:, :D_out].set(Wb.reshape(1, D_out).astype(f32))

    # --- Stage 1: projection of the source features (done exactly once) ---
    n_src = pl.pallas_call(
        _project_kernel,
        out_shape=jax.ShapeDtypeStruct((S_p, H_p), bf16),
        grid_spec=pltpu.PrefetchScalarGridSpec(
            num_scalar_prefetch=0,
            grid=(S_p // ts,),
            in_specs=[
                pl.BlockSpec((ts, D_in_p), lambda i: (i, 0)),      # h_src tile
                pl.BlockSpec((D_in_p, H_p), lambda i: (0, 0)),     # Qw (resident)
                pl.BlockSpec((1, H_p), lambda i: (0, 0)),          # Qb (resident)
            ],
            out_specs=pl.BlockSpec((ts, H_p), lambda i: (i, 0)),
        ),
        compiler_params=pltpu.CompilerParams(
            dimension_semantics=("parallel",),
            vmem_limit_bytes=_VMEM_LIMIT),
    )(h_src_p, Qw_p, Qb_p)

    # --- Stage 2: aggregation over S (reduction axis) + output head ---
    z = pl.pallas_call(
        _aggregate_kernel,
        out_shape=jax.ShapeDtypeStruct((B_p, D_out_p), f32),
        grid_spec=pltpu.PrefetchScalarGridSpec(
            num_scalar_prefetch=0,
            grid=(B_p // tb, S_p // ts),
            in_specs=[
                pl.BlockSpec((tb, D_in_p), lambda i, j: (i, 0)),       # h_dst tile
                pl.BlockSpec((tb, ts), lambda i, j: (i, j)),           # A tile (streamed)
                pl.BlockSpec((ts, H_p), lambda i, j: (j, 0)),          # n_src tile (streamed)
                pl.BlockSpec((H_p, D_out_p), lambda i, j: (0, 0)),     # W1 (resident)
                pl.BlockSpec((D_in_p, D_out_p), lambda i, j: (0, 0)),  # W2 (resident)
                pl.BlockSpec((1, D_out_p), lambda i, j: (0, 0)),       # Wb (resident)
            ],
            out_specs=pl.BlockSpec((tb, D_out_p), lambda i, j: (i, 0)),
            scratch_shapes=[
                pltpu.VMEM((tb, H_p), f32),   # accumulator for A @ n_src
                pltpu.VMEM((tb, 1), f32),     # accumulator for ws row-sums
            ],
        ),
        compiler_params=pltpu.CompilerParams(
            dimension_semantics=("parallel", "arbitrary"),
            vmem_limit_bytes=_VMEM_LIMIT),
    )(h_dst_p, A_p, n_src, W1_p, W2_p, Wb_p)

    return z[:B, :D_out]


def _xavier_uniform(key, fan_in, fan_out, gain):
    # matches nn.init.xavier_uniform_ on a (fan_out, fan_in) weight; returned transposed.
    bound = gain * jnp.sqrt(6.0 / (fan_in + fan_out))
    return jax.random.uniform(key, (fan_in, fan_out), jnp.float32, -bound, bound)


def _reference(h_src, h_dst, A, Qw, Qb, W1, W2, Wb):
    n_src = jax.nn.relu(h_src @ Qw + Qb)
    n = A @ n_src
    ws = jnp.clip(jnp.sum(A, axis=1, keepdims=True), 1.0, None)
    z = jax.nn.relu((n / ws) @ W1 + h_dst @ W2 + Wb)
    zn = jnp.sqrt(jnp.sum(z * z, axis=1, keepdims=True))
    zn = jnp.where(zn == 0.0, 1.0, zn)
    return z / zn


if __name__ == "__main__":
    # Small, deterministic problem: 64 source nodes, 16 dst nodes, 128 edges.
    input_dims, hidden_dims, output_dims = 64, 32, 32
    num_src, num_dst, num_edges = 64, 16, 128

    key = jax.random.PRNGKey(0)
    k_h, k_e_src, k_e_dst, k_e_w, k_q, k_w = jax.random.split(key, 6)

    # node features; PinSAGE blocks include dst nodes at the front of the src set
    h_src = jax.random.normal(k_h, (num_src, input_dims), jnp.float32)
    h_dst = h_src[:num_dst]

    # random edge list (u -> v) with positive sampling weights, densified into A (B, S)
    e_src = jax.random.randint(k_e_src, (num_edges,), 0, num_src)
    e_dst = jax.random.randint(k_e_dst, (num_edges,), 0, num_dst)
    e_w = jax.random.uniform(k_e_w, (num_edges,), jnp.float32, 0.1, 2.0)
    A = jnp.zeros((num_dst, num_src), jnp.float32).at[e_dst, e_src].add(e_w)

    # parameters: xavier_uniform(gain=sqrt(2) for relu), biases = 0
    gain = jnp.sqrt(2.0)
    Qw = _xavier_uniform(k_q, input_dims, hidden_dims, gain)          # (D_in, H)
    Qb = jnp.zeros((1, hidden_dims), jnp.float32)
    Wfull = _xavier_uniform(k_w, input_dims + hidden_dims, output_dims, gain)
    W1 = Wfull[:hidden_dims]                                          # (H, D_out)   -> aggregated part
    W2 = Wfull[hidden_dims:]                                          # (D_in, D_out)-> h_dst part
    Wb = jnp.zeros((1, output_dims), jnp.float32)

    z = weighted_sage_conv(h_src, h_dst, A, Qw, Qb, W1, W2, Wb)
    z = jax.block_until_ready(z)

    z_ref = _reference(h_src, h_dst, A, Qw, Qb, W1, W2, Wb)
    assert z.shape == (num_dst, output_dims)
    # bf16 matmul operands with f32 accumulation -> loosened tolerance vs f32 reference.
    assert jnp.allclose(z, z_ref, atol=2e-2, rtol=2e-2), float(jnp.max(jnp.abs(z - z_ref)))
    print("KERNEL_OK")
</pallas_src>

<mosaic_0001>
module attributes {stable_mosaic.version = 11 : i64} {
  func.func @_project_kernel(%arg0: i32, %arg1: memref<128x128xbf16, #tpu.memory_space<vmem>>, %arg2: memref<128x128xbf16, #tpu.memory_space<vmem>>, %arg3: memref<1x128xf32, #tpu.memory_space<vmem>>, %arg4: memref<128x128xbf16, #tpu.memory_space<vmem>>) attributes {dimension_semantics = [#tpu.dimension_semantics<parallel>], iteration_bounds = array<i64: 1>, scalar_prefetch = 0 : i64, scratch_operands = 0 : i64, tpu.core_type = #tpu.core_type<tc>, window_params = [{transform_indices = @transform_0, window_bounds = array<i64: 128, 128>}, {pipeline_mode = #tpu.pipeline_mode<synchronous>, transform_indices = @transform_1, window_bounds = array<i64: 128, 128>}, {pipeline_mode = #tpu.pipeline_mode<synchronous>, transform_indices = @transform_2, window_bounds = array<i64: 1, 128>}, {transform_indices = @transform_3, window_bounds = array<i64: 128, 128>}]} {
    %c0 = arith.constant 0 : index
    %c0_0 = arith.constant 0 : index
    %0 = vector.load %arg1[%c0, %c0_0] : memref<128x128xbf16, #tpu.memory_space<vmem>>, vector<128x128xbf16>
    %c0_1 = arith.constant 0 : index
    %c0_2 = arith.constant 0 : index
    %1 = vector.load %arg2[%c0_1, %c0_2] : memref<128x128xbf16, #tpu.memory_space<vmem>>, vector<128x128xbf16>
    %cst = arith.constant dense<0.000000e+00> : vector<128x128xf32>
    %2 = tpu.matmul %0, %1, %cst {dimension_numbers = #tpu.dot_dimension_numbers<[1], [0], [0], [1], [0, 0, 1, 1], [], []>} : vector<128x128xbf16>, vector<128x128xbf16>, vector<128x128xf32> -> vector<128x128xf32>
    %c0_3 = arith.constant 0 : index
    %c0_4 = arith.constant 0 : index
    %3 = vector.load %arg3[%c0_3, %c0_4] : memref<1x128xf32, #tpu.memory_space<vmem>>, vector<1x128xf32>
    %4 = vector.broadcast %3 : vector<1x128xf32> to vector<128x128xf32>
    %5 = arith.addf %2, %4 : vector<128x128xf32>
    %cst_5 = arith.constant 0.000000e+00 : f32
    %6 = vector.broadcast %cst_5 : f32 to vector<128x128xf32>
    %7 = arith.maximumf %5, %6 : vector<128x128xf32>
    %8 = arith.truncf %7 : vector<128x128xf32> to vector<128x128xbf16>
    %c0_6 = arith.constant 0 : index
    %c0_7 = arith.constant 0 : index
    %9 = vector.load %arg4[%c0_6, %c0_7] : memref<128x128xbf16, #tpu.memory_space<vmem>>, vector<128x128xbf16>
    tpu.vector_store %arg4[%c0_6, %c0_7], %8 {strides = array<i32>} : memref<128x128xbf16, #tpu.memory_space<vmem>>, vector<128x128xbf16>,
    return
  }
  func.func @transform_0(%arg0: i32) -> (i32, i32) {
    %c0_i32 = arith.constant 0 : i32
    %c0_i32_0 = arith.constant 0 : i32
    return %arg0, %c0_i32 : i32, i32
  }
  func.func @transform_1(%arg0: i32) -> (i32, i32) {
    %c0_i32 = arith.constant 0 : i32
    %c0_i32_0 = arith.constant 0 : i32
    %c0_i32_1 = arith.constant 0 : i32
    return %c0_i32, %c0_i32_0 : i32, i32
  }
  func.func @transform_2(%arg0: i32) -> (i32, i32) {
    %c0_i32 = arith.constant 0 : i32
    %c0_i32_0 = arith.constant 0 : i32
    %c0_i32_1 = arith.constant 0 : i32
    return %c0_i32, %c0_i32_0 : i32, i32
  }
  func.func @transform_3(%arg0: i32) -> (i32, i32) {
    %c0_i32 = arith.constant 0 : i32
    %c0_i32_0 = arith.constant 0 : i32
    return %arg0, %c0_i32 : i32, i32
  }
}

</mosaic_0001>

<llo_original>
// kernel: tpu_custom_call.1
$region0: #{tpu_custom_call.1}
  #allocation0 [shape = 'u32[]', space=smem, size = 0x4, offset = 0x4, fixed_abs, tag = 'smem constant byte address 0x4 - core index']
  #allocation1 [shape = 'u32[144,128]{1,0:T(1,128)}', space=vmem, size = 0x12000, scoped, tag = 'internal scratch']
  %s0 = inlined_call_operand.hbm [shape: bf16[128,128], index: 0, kind: input, shape index: {}]
  %s1 = inlined_call_operand.hbm [shape: bf16[128,128], index: 1, kind: input, shape index: {}]
  %s2 = inlined_call_operand.vmem [shape: f32[1,128], index: 2, kind: input, shape index: {}]
  %s3 = inlined_call_operand.hbm [shape: bf16[128,128], index: 3, kind: output, shape index: {}]
  %s4 = sld [smem:[#allocation0]]
  $region30: #{tpu_custom_call.1} parent=0
    _
  %s6 = ssub.s32 1, %s4
  %s7 = scalar_select 0, %s6, %s4
  $region1: #{tpu_custom_call.1} parent=0
    #allocation2 [shape = 'u8[32768]{0}', space=vmem, size = 0x8000, scoped, tag = 'input window, operand 0, single buffered']
    #allocation3 [shape = 's32[1]{0}', space=sflag, size = 0x4, scoped, tag = 'scoped memory for tpu_custom_call.1']
    #allocation4 [shape = 's32[1]{0}', space=sflag, size = 0x4, scoped, tag = 'scoped memory for tpu_custom_call.1']
    #allocation5 [shape = 'u8[32768]{0}', space=vmem, size = 0x8000, scoped, tag = 'input window, operand 1, single buffered']
    #allocation6 [shape = 's32[1]{0}', space=sflag, size = 0x4, scoped, tag = 'scoped memory for tpu_custom_call.1']
    #allocation7 [shape = 'u8[32768]{0}', space=vmem, size = 0x8000, scoped, tag = 'output window, operand 0, single buffered']
    %8 = vsyncpa [#allocation3], 0
    %9 = vsyncpa [#allocation6], 0
    %10 = vsyncpa [#allocation4], 0
    // Predicated region
    $region2: #{tpu_custom_call.1} parent=1 // pred_check
      _
    $region3: #{tpu_custom_call.1} parent=1 // pred_check_branch
      %12 = sbr.rel (0) target = $region5
    $region4: #{tpu_custom_call.1} parent=1 // pred_region
      %s14 = ssub.s32 1024, 1024
      %15 = vsyncadd [#allocation3], %s14
      %s16 = sshll.u32 [#allocation2], 4
      %s17 = int_to_ptr.vmem [resolvable:$true] %s16
      %22 = dma.hbm_to_vmem [thread:$0]  %s0, 1024, %s17, [#allocation3], 64, 64, 4
    $region5: #{tpu_custom_call.1} parent=1 // pred_fallthru
      _
    // Predicated region
    $region6: #{tpu_custom_call.1} parent=1 // pred_check
      _
    $region7: #{tpu_custom_call.1} parent=1 // pred_check_branch
      %24 = sbr.rel (0) target = $region9
    $region8: #{tpu_custom_call.1} parent=1 // pred_region
      %s26 = ssub.s32 1024, 1024
      %27 = vsyncadd [#allocation6], %s26
      %s28 = sshll.u32 [#allocation5], 4
      %s29 = int_to_ptr.vmem [resolvable:$true] %s28
      %34 = dma.hbm_to_vmem [thread:$0]  %s1, 1024, %s29, [#allocation6], 64, 64, 4
    $region9: #{tpu_custom_call.1} parent=1 // pred_fallthru
      _
    // Predicated region
    $region10: #{tpu_custom_call.1} parent=1 // pred_check
      _
    $region11: #{tpu_custom_call.1} parent=1 // pred_check_branch
      %36 = sbr.rel (0) target = $region13
    $region12: #{tpu_custom_call.1} parent=1 // pred_region
      _
    $region13: #{tpu_custom_call.1} parent=1 // pred_fallthru
      _
    // Predicated region
    $region14: #{tpu_custom_call.1} parent=1 // pred_check
      _
    $region15: #{tpu_custom_call.1} parent=1 // pred_check_branch
      %38 = sbr.rel (0) target = $region17
    $region16: #{tpu_custom_call.1} parent=1 // pred_region
      %39 = dma.done [#allocation3], 1024
    $region17: #{tpu_custom_call.1} parent=1 // pred_fallthru
      _
    // Predicated region
    $region18: #{tpu_custom_call.1} parent=1 // pred_check
      _
    $region19: #{tpu_custom_call.1} parent=1 // pred_check_branch
      %41 = sbr.rel (0) target = $region21
    $region20: #{tpu_custom_call.1} parent=1 // pred_region
      %42 = dma.done [#allocation6], 1024
    $region21: #{tpu_custom_call.1} parent=1 // pred_fallthru
      _
    %v44 = vld [vmem:[#allocation2] sm:$0xf]
    %v45 = vld [vmem:[#allocation2 + $0x4] sm:$0xf]
    %v46 = vld [vmem:[#allocation2 + $0x8] sm:$0xf]
    %v47 = vld [vmem:[#allocation2 + $0xc] sm:$0xf]
    %v48 = vld [vmem:[#allocation2 + $0x10] sm:$0xf]
    %v49 = vld [vmem:[#allocation2 + $0x14] sm:$0xf]
    %v50 = vld [vmem:[#allocation2 + $0x18] sm:$0xf]
    %v51 = vld [vmem:[#allocation2 + $0x1c] sm:$0xf]
    %v52 = vld [vmem:[#allocation2 + $0x20] sm:$0xf]
    %v53 = vld [vmem:[#allocation2 + $0x24] sm:$0xf]
    %v54 = vld [vmem:[#allocation2 + $0x28] sm:$0xf]
    %v55 = vld [vmem:[#allocation2 + $0x2c] sm:$0xf]
    %v56 = vld [vmem:[#allocation2 + $0x30] sm:$0xf]
    %v57 = vld [vmem:[#allocation2 + $0x34] sm:$0xf]
    %v58 = vld [vmem:[#allocation2 + $0x38] sm:$0xf]
    %v59 = vld [vmem:[#allocation2 + $0x3c] sm:$0xf]
    %v60 = vld [vmem:[#allocation5] sm:$0xf]
    %v61 = vld [vmem:[#allocation5 + $0x4] sm:$0xf]
    %v62 = vld [vmem:[#allocation5 + $0x8] sm:$0xf]
    %v63 = vld [vmem:[#allocation5 + $0xc] sm:$0xf]
    %v64 = vld [vmem:[#allocation5 + $0x10] sm:$0xf]
    %v65 = vld [vmem:[#allocation5 + $0x14] sm:$0xf]
    %v66 = vld [vmem:[#allocation5 + $0x18] sm:$0xf]
    %v67 = vld [vmem:[#allocation5 + $0x1c] sm:$0xf]
    %v68 = vld [vmem:[#allocation5 + $0x20] sm:$0xf]
    %v69 = vld [vmem:[#allocation5 + $0x24] sm:$0xf]
    %v70 = vld [vmem:[#allocation5 + $0x28] sm:$0xf]
    %v71 = vld [vmem:[#allocation5 + $0x2c] sm:$0xf]
    %v72 = vld [vmem:[#allocation5 + $0x30] sm:$0xf]
    %v73 = vld [vmem:[#allocation5 + $0x34] sm:$0xf]
    %v74 = vld [vmem:[#allocation5 + $0x38] sm:$0xf]
    %v75 = vld [vmem:[#allocation5 + $0x3c] sm:$0xf]
    %v76 = vld [vmem:[%s2] sm:$0x1]
    %v78 = vlaneseq
    %v79 = vshrl.u32 %v78, 7
    %v80 = vsub.s32 0, %v79
    %v81 = vrot.slane %v76, %v80
    %v99 = vunpack.c.l.b16 %v44
    %v100 = vunpack.c.l.b16 %v45
    %v101 = vunpack.c.l.b16 %v46
    %v102 = vunpack.c.l.b16 %v47
    %v103 = vunpack.c.l.b16 %v48
    %v104 = vunpack.c.l.b16 %v49
    %v105 = vunpack.c.l.b16 %v50
    %v106 = vunpack.c.l.b16 %v51
    %v107 = vunpack.c.l.b16 %v52
    %v108 = vunpack.c.l.b16 %v53
    %v109 = vunpack.c.l.b16 %v54
    %v110 = vunpack.c.l.b16 %v55
    %v111 = vunpack.c.l.b16 %v56
    %v112 = vunpack.c.l.b16 %v57
    %v113 = vunpack.c.l.b16 %v58
    %v114 = vunpack.c.l.b16 %v59
    %v115 = vpack.c.b16 %v100, %v99
    %v116 = vpack.c.b16 %v102, %v101
    %v117 = vpack.c.b16 %v104, %v103
    %v118 = vpack.c.b16 %v106, %v105
    %v119 = vpack.c.b16 %v108, %v107
    %v120 = vpack.c.b16 %v110, %v109
    %v121 = vpack.c.b16 %v112, %v111
    %v122 = vpack.c.b16 %v114, %v113
    %v147 = vunpack.c.l.b16 %v60
    %v148 = vunpack.c.l.b16 %v61
    %v149 = vunpack.c.l.b16 %v62
    %v150 = vunpack.c.l.b16 %v63
    %v151 = vunpack.c.l.b16 %v64
    %v152 = vunpack.c.l.b16 %v65
    %v153 = vunpack.c.l.b16 %v66
    %v154 = vunpack.c.l.b16 %v67
    %v155 = vunpack.c.l.b16 %v68
    %v156 = vunpack.c.l.b16 %v69
    %v157 = vunpack.c.l.b16 %v70
    %v158 = vunpack.c.l.b16 %v71
    %v159 = vunpack.c.l.b16 %v72
    %v160 = vunpack.c.l.b16 %v73
    %v161 = vunpack.c.l.b16 %v74
    %v162 = vunpack.c.l.b16 %v75
    %v163 = vpack.c.b16 %v148, %v147
    %v164 = vpack.c.b16 %v150, %v149
    %v165 = vpack.c.b16 %v152, %v151
    %v166 = vpack.c.b16 %v154, %v153
    %v167 = vpack.c.b16 %v156, %v155
    %v168 = vpack.c.b16 %v158, %v157
    %v169 = vpack.c.b16 %v160, %v159
    %v170 = vpack.c.b16 %v162, %v161
    %179 = vmatprep.subr.bf16.mxu0 0
    %180 = vmatpush1.bf16.msra.mxu0 %v163
    %181 = vmatprep.subr.bf16.mxu0 0
    %182 = vmatpush1.bf16.msra.mxu0 %v164
    %183 = vmatprep.subr.bf16.mxu0 0
    %184 = vmatpush1.bf16.msra.mxu0 %v165
    %185 = vmatprep.subr.bf16.mxu0 0
    %186 = vmatpush1.bf16.msra.mxu0 %v166
    %187 = vmatprep.subr.bf16.mxu0 0
    %188 = vmatpush1.bf16.msra.mxu0 %v167
    %189 = vmatprep.subr.bf16.mxu0 0
    %190 = vmatpush1.bf16.msra.mxu0 %v168
    %191 = vmatprep.subr.bf16.mxu0 0
    %192 = vmatpush1.bf16.msra.mxu0 %v169
    %193 = vmatprep.subr.bf16.mxu0 0
    %194 = vmatpush1.bf16.msra.mxu0 %v170
    %195 = vmatprep.subr.bf16.mxu0 0
    %196 = vmatpush1.bf16.msra.mxu0 0
    %197 = vmatprep.subr.bf16.mxu0 0
    %198 = vmatpush1.bf16.msra.mxu0 0
    %199 = vmatprep.subr.bf16.mxu0 0
    %200 = vmatpush1.bf16.msra.mxu0 0
    %201 = vmatprep.subr.bf16.mxu0 0
    %202 = vmatpush1.bf16.msra.mxu0 0
    %203 = vmatprep.subr.bf16.mxu0 0
    %204 = vmatpush1.bf16.msra.mxu0 0
    %205 = vmatprep.subr.bf16.mxu0 0
    %206 = vmatpush1.bf16.msra.mxu0 0
    %207 = vmatprep.subr.bf16.mxu0 0
    %208 = vmatpush1.bf16.msra.mxu0 0
    %209 = vmatprep.subr.bf16.mxu0 0
    %210 = vmatpush1.bf16.msra.mxu0 0
    %211 = vmatprep.mubr.bf16.mxu0 0
    %212 = vmatmul.mubr.bf16.gmra.mrb[0].mxu0 %v115
    %v213 = vpop.f32.mrb[0].mxu0
    %v214 = vadd.f32 %v81, %v213
    %v215 = vpop.f32.mrb[0].mxu0
    %v216 = vpop.f32.mrb[0].mxu0
    %v217 = vadd.f32 %v81, %v216
    %v218 = vpop.f32.mrb[0].mxu0
    %219 = vmatprep.mubr.bf16.mxu0 0
    %220 = vmatmul.mubr.bf16.gmra.mrb[0].mxu0 %v116
    %v221 = vpop.f32.mrb[0].mxu0
    %v222 = vadd.f32 %v81, %v221
    %v223 = vpop.f32.mrb[0].mxu0
    %v224 = vpop.f32.mrb[0].mxu0
    %v225 = vadd.f32 %v81, %v224
    %v226 = vpop.f32.mrb[0].mxu0
    %227 = vmatprep.mubr.bf16.mxu0 0
    %228 = vmatmul.mubr.bf16.gmra.mrb[0].mxu0 %v117
    %v229 = vpop.f32.mrb[0].mxu0
    %v230 = vadd.f32 %v81, %v229
    %v231 = vpop.f32.mrb[0].mxu0
    %v232 = vpop.f32.mrb[0].mxu0
    %v233 = vadd.f32 %v81, %v232
    %v234 = vpop.f32.mrb[0].mxu0
    %235 = vmatprep.mubr.bf16.mxu0 0
    %236 = vmatmul.mubr.bf16.gmra.mrb[0].mxu0 %v118
    %v237 = vpop.f32.mrb[0].mxu0
    %v238 = vadd.f32 %v81, %v237
    %v239 = vpop.f32.mrb[0].mxu0
    %v240 = vpop.f32.mrb[0].mxu0
    %v241 = vadd.f32 %v81, %v240
    %v242 = vpop.f32.mrb[0].mxu0
    %243 = vmatprep.mubr.bf16.mxu0 0
    %244 = vmatmul.mubr.bf16.gmra.mrb[0].mxu0 %v119
    %v245 = vpop.f32.mrb[0].mxu0
    %v246 = vadd.f32 %v81, %v245
    %v247 = vpop.f32.mrb[0].mxu0
    %v248 = vpop.f32.mrb[0].mxu0
    %v249 = vadd.f32 %v81, %v248
    %v250 = vpop.f32.mrb[0].mxu0
    %251 = vmatprep.mubr.bf16.mxu0 0
    %252 = vmatmul.mubr.bf16.gmra.mrb[0].mxu0 %v120
    %v253 = vpop.f32.mrb[0].mxu0
    %v254 = vadd.f32 %v81, %v253
    %v255 = vpop.f32.mrb[0].mxu0
    %v256 = vpop.f32.mrb[0].mxu0
    %v257 = vadd.f32 %v81, %v256
    %v258 = vpop.f32.mrb[0].mxu0
    %259 = vmatprep.mubr.bf16.mxu0 0
    %260 = vmatmul.mubr.bf16.gmra.mrb[0].mxu0 %v121
    %v261 = vpop.f32.mrb[0].mxu0
    %v262 = vadd.f32 %v81, %v261
    %v263 = vpop.f32.mrb[0].mxu0
    %v264 = vpop.f32.mrb[0].mxu0
    %v265 = vadd.f32 %v81, %v264
    %v266 = vpop.f32.mrb[0].mxu0
    %267 = vmatprep.mubr.bf16.mxu0 0
    %268 = vmatmul.mubr.bf16.gmra.mrb[0].mxu0 %v122
    %v269 = vpop.f32.mrb[0].mxu0
    %v270 = vadd.f32 %v81, %v269
    %v271 = vpop.f32.mrb[0].mxu0
    %v272 = vpop.f32.mrb[0].mxu0
    %v273 = vadd.f32 %v81, %v272
    %v274 = vpop.f32.mrb[0].mxu0
    %275 = vdwg.mxu0
    %v276 = vmax.f32 %v214, 0.0
    %v277 = vmax.f32 %v217, 0.0
    %v278 = vmax.f32 %v222, 0.0
    %v279 = vmax.f32 %v225, 0.0
    %v280 = vmax.f32 %v230, 0.0
    %v281 = vmax.f32 %v233, 0.0
    %v282 = vmax.f32 %v238, 0.0
    %v283 = vmax.f32 %v241, 0.0
    %v284 = vmax.f32 %v246, 0.0
    %v285 = vmax.f32 %v249, 0.0
    %v286 = vmax.f32 %v254, 0.0
    %v287 = vmax.f32 %v257, 0.0
    %v288 = vmax.f32 %v262, 0.0
    %v289 = vmax.f32 %v265, 0.0
    %v290 = vmax.f32 %v270, 0.0
    %v291 = vmax.f32 %v273, 0.0
    %v292 = vpack.c.bf16 %v277, %v276
    %v293 = vpack.c.bf16 %v279, %v278
    %v294 = vpack.c.bf16 %v281, %v280
    %v295 = vpack.c.bf16 %v283, %v282
    %v296 = vpack.c.bf16 %v285, %v284
    %v297 = vpack.c.bf16 %v287, %v286
    %v298 = vpack.c.bf16 %v289, %v288
    %v299 = vpack.c.bf16 %v291, %v290
    %v308 = vunpack.c.l.b16 %v292
    %v309 = vunpack.c.h.b16 %v292
    %v310 = vunpack.c.l.b16 %v293
    %v311 = vunpack.c.h.b16 %v293
    %v312 = vunpack.c.l.b16 %v294
    %v313 = vunpack.c.h.b16 %v294
    %v314 = vunpack.c.l.b16 %v295
    %v315 = vunpack.c.h.b16 %v295
    %v316 = vunpack.c.l.b16 %v296
    %v317 = vunpack.c.h.b16 %v296
    %v318 = vunpack.c.l.b16 %v297
    %v319 = vunpack.c.h.b16 %v297
    %v320 = vunpack.c.l.b16 %v298
    %v321 = vunpack.c.h.b16 %v298
    %v322 = vunpack.c.l.b16 %v299
    %v323 = vunpack.c.h.b16 %v299
    %v324 = vpack.c.b16 %v308, %v308
    %v325 = vpack.c.b16 %v309, %v309
    %v326 = vpack.c.b16 %v310, %v310
    %v327 = vpack.c.b16 %v311, %v311
    %v328 = vpack.c.b16 %v312, %v312
    %v329 = vpack.c.b16 %v313, %v313
    %v330 = vpack.c.b16 %v314, %v314
    %v331 = vpack.c.b16 %v315, %v315
    %v332 = vpack.c.b16 %v316, %v316
    %v333 = vpack.c.b16 %v317, %v317
    %v334 = vpack.c.b16 %v318, %v318
    %v335 = vpack.c.b16 %v319, %v319
    %v336 = vpack.c.b16 %v320, %v320
    %v337 = vpack.c.b16 %v321, %v321
    %v338 = vpack.c.b16 %v322, %v322
    %v339 = vpack.c.b16 %v323, %v323
    %356 = vst [vmem:[#allocation7] sm:$0xf] %v324
    %357 = vst [vmem:[#allocation7 + $0x4] sm:$0xf] %v325
    %358 = vst [vmem:[#allocation7 + $0x8] sm:$0xf] %v326
    %359 = vst [vmem:[#allocation7 + $0xc] sm:$0xf] %v327
    %360 = vst [vmem:[#allocation7 + $0x10] sm:$0xf] %v328
    %361 = vst [vmem:[#allocation7 + $0x14] sm:$0xf] %v329
    %362 = vst [vmem:[#allocation7 + $0x18] sm:$0xf] %v330
    %363 = vst [vmem:[#allocation7 + $0x1c] sm:$0xf] %v331
    %364 = vst [vmem:[#allocation7 + $0x20] sm:$0xf] %v332
    %365 = vst [vmem:[#allocation7 + $0x24] sm:$0xf] %v333
    %366 = vst [vmem:[#allocation7 + $0x28] sm:$0xf] %v334
    %367 = vst [vmem:[#allocation7 + $0x2c] sm:$0xf] %v335
    %368 = vst [vmem:[#allocation7 + $0x30] sm:$0xf] %v336
    %369 = vst [vmem:[#allocation7 + $0x34] sm:$0xf] %v337
    %370 = vst [vmem:[#allocation7 + $0x38] sm:$0xf] %v338
    %371 = vst [vmem:[#allocation7 + $0x3c] sm:$0xf] %v339
    // Predicated region
    $region22: #{tpu_custom_call.1} parent=1 // pred_check
      _
    $region23: #{tpu_custom_call.1} parent=1 // pred_check_branch
      %373 = sbr.rel (0) target = $region25
    $region24: #{tpu_custom_call.1} parent=1 // pred_region
      %s375 = ssub.s32 1024, 1024
      %376 = vsyncadd [#allocation4], %s375
      %s377 = sshll.u32 [#allocation7], 4
      %s378 = int_to_ptr.vmem [resolvable:$true] %s377
      %383 = dma.vmem_to_hbm [thread:$0]  %s378, 1024, %s3, [#allocation4], 64, 64, 4
    $region25: #{tpu_custom_call.1} parent=1 // pred_fallthru
      _
    // Predicated region
    $region26: #{tpu_custom_call.1} parent=1 // pred_check
      _
    $region27: #{tpu_custom_call.1} parent=1 // pred_check_branch
      %385 = sbr.rel (0) target = $region29
    $region28: #{tpu_custom_call.1} parent=1 // pred_region
      %386 = dma.done [#allocation4], 1024
    $region29: #{tpu_custom_call.1} parent=1 // pred_fallthru
      _
    %387 = vsyncpa [#allocation3], 1
    %388 = vsyncpa [#allocation6], 1
    %389 = vsyncpa [#allocation4], 1

</llo_original>
